<compile_context>
chip_gen: v6e
topology: v6e:2x2x1
jax: 0.10.0
libtpu: 0.0.40
codegen_flags: <defaults>
</compile_context>

<pallas_src>
import jax
import jax.numpy as jnp
from jax.experimental import pallas as pl
from jax.experimental.pallas import tpu as pltpu


# ---------------------------------------------------------------------------
# Pallas kernel
# ---------------------------------------------------------------------------
def _mobn_kernel(x_ref, g_ref, b_ref, o_ref):
    x = x_ref[...]                                   # (tile, HW) f32
    mu = jnp.mean(x, axis=-1, keepdims=True)         # (tile, 1): lane reduce (XLU)
    g = g_ref[...]                                   # (tile, 1)
    shift = b_ref[...] - mu * g                      # per-row column math (cheap)
    o_ref[...] = x * g + shift                       # fused scale + shift


def _pick_row_tile(rows, hw, bytes_per_elem=4, vmem_budget=16 * 1024 * 1024):
    # Live VMEM per grid step ~ (x + out) * 2 buffers = 4 * tile * hw * bytes.
    # Budget chosen so double-buffered tiles fit comfortably on v5e/v6e/v7x.
    max_rows = max(8, vmem_budget // (4 * hw * bytes_per_elem))
    tile = min(rows, 512, max_rows)
    tile = max(8, (tile // 8) * 8)                   # sublane-aligned
    return tile


# ---------------------------------------------------------------------------
# Wrapper
# ---------------------------------------------------------------------------
def mean_only_batchnorm(x_nchw, weight, bias):
    """out[n,c,h,w] = (x - mean_{h,w} x[n,c]) * weight[c] + bias[c]."""
    N, C, H, W = x_nchw.shape
    HW = H * W
    rows = N * C

    x2 = x_nchw.reshape(rows, HW).astype(jnp.float32)
    # Per-row channel params (row index = n*C + c): tile weight/bias over batch.
    g_rows = jnp.tile(weight.astype(jnp.float32), N).reshape(rows, 1)
    b_rows = jnp.tile(bias.astype(jnp.float32), N).reshape(rows, 1)

    tile = _pick_row_tile(rows, HW)
    padded_rows = pl.cdiv(rows, tile) * tile
    if padded_rows != rows:
        pad = padded_rows - rows
        x2 = jnp.pad(x2, ((0, pad), (0, 0)))
        g_rows = jnp.pad(g_rows, ((0, pad), (0, 0)))
        b_rows = jnp.pad(b_rows, ((0, pad), (0, 0)))

    out = pl.pallas_call(
        _mobn_kernel,
        out_shape=jax.ShapeDtypeStruct((padded_rows, HW), jnp.float32),
        grid=(padded_rows // tile,),
        in_specs=[
            pl.BlockSpec((tile, HW), lambda i: (i, 0)),
            pl.BlockSpec((tile, 1), lambda i: (i, 0)),
            pl.BlockSpec((tile, 1), lambda i: (i, 0)),
        ],
        out_specs=pl.BlockSpec((tile, HW), lambda i: (i, 0)),
        compiler_params=pltpu.CompilerParams(
            dimension_semantics=("parallel",),
            vmem_limit_bytes=32 * 1024 * 1024,
        ),
    )(x2, g_rows, b_rows)

    out = out[:rows].reshape(N, C, H, W)
    return out.astype(x_nchw.dtype)


def updated_running_mean(x_nchw, running_mean, momentum=0.1):
    # TODO(synk): stateful buffer mutation has no in-kernel equivalent; it does
    # not affect the forward output, so it is computed as tiny pure-JAX glue.
    N, C = x_nchw.shape[0], x_nchw.shape[1]
    avg = jnp.mean(x_nchw.reshape(N, C, -1), axis=2)        # (N, C)
    return (1.0 - momentum) * running_mean + momentum * jnp.mean(avg, axis=0)


# ---------------------------------------------------------------------------
# Pure-JAX reference (for correctness check)
# ---------------------------------------------------------------------------
def reference_mean_only_batchnorm(x, weight, bias):
    N, C, H, W = x.shape
    avg = jnp.mean(x.reshape(N, C, -1), axis=2)              # (N, C)
    out = x - avg.reshape(N, C, 1, 1)
    return out * weight.reshape(1, C, 1, 1) + bias.reshape(1, C, 1, 1)


# ---------------------------------------------------------------------------
# Main
# ---------------------------------------------------------------------------
if __name__ == "__main__":
    key = jax.random.PRNGKey(0)
    k1, k2, k3, k4, k5, k6 = jax.random.split(key, 6)

    # Case 1: module-sized example (batch=2, channels=4, 16x16).
    x1 = jax.random.normal(k1, (2, 4, 16, 16), jnp.float32)
    w1 = jax.random.uniform(k2, (4,), jnp.float32)            # weight.uniform_()
    b1 = 0.1 * jax.random.normal(k3, (4,), jnp.float32)
    out1 = jax.block_until_ready(mean_only_batchnorm(x1, w1, b1))
    ref1 = reference_mean_only_batchnorm(x1, w1, b1)
    assert out1.shape == x1.shape
    assert jnp.allclose(out1, ref1, atol=1e-5, rtol=1e-5), \
        float(jnp.max(jnp.abs(out1 - ref1)))

    # Case 2: exercises row padding and a multi-block grid (rows=18 -> tiles).
    x2 = jax.random.normal(k4, (3, 6, 8, 8), jnp.float32)
    w2 = jax.random.uniform(k5, (6,), jnp.float32)
    b2 = 0.1 * jax.random.normal(k6, (6,), jnp.float32)
    out2 = jax.block_until_ready(mean_only_batchnorm(x2, w2, b2))
    ref2 = reference_mean_only_batchnorm(x2, w2, b2)
    assert out2.shape == x2.shape
    assert jnp.allclose(out2, ref2, atol=1e-5, rtol=1e-5), \
        float(jnp.max(jnp.abs(out2 - ref2)))

    # Buffer-update glue (not part of the output path) sanity check.
    rm = jax.block_until_ready(updated_running_mean(x1, jnp.zeros((4,), jnp.float32)))
    assert rm.shape == (4,)

    print("KERNEL_OK")
</pallas_src>

<mosaic_0001>
module attributes {stable_mosaic.version = 11 : i64} {
  func.func @_mobn_kernel(%arg0: i32, %arg1: memref<8x256xf32, #tpu.memory_space<vmem>>, %arg2: memref<8x1xf32, #tpu.memory_space<vmem>>, %arg3: memref<8x1xf32, #tpu.memory_space<vmem>>, %arg4: memref<8x256xf32, #tpu.memory_space<vmem>>) attributes {dimension_semantics = [#tpu.dimension_semantics<parallel>], iteration_bounds = array<i64: 1>, scalar_prefetch = 0 : i64, scratch_operands = 0 : i64, tpu.core_type = #tpu.core_type<tc>, window_params = [{transform_indices = @transform_0, window_bounds = array<i64: 8, 256>}, {transform_indices = @transform_1, window_bounds = array<i64: 8, 1>}, {transform_indices = @transform_2, window_bounds = array<i64: 8, 1>}, {transform_indices = @transform_3, window_bounds = array<i64: 8, 256>}]} {
    %c0 = arith.constant 0 : index
    %c0_0 = arith.constant 0 : index
    %0 = vector.load %arg1[%c0, %c0_0] : memref<8x256xf32, #tpu.memory_space<vmem>>, vector<8x256xf32>
    %cst = arith.constant dense<0.000000e+00> : vector<8xf32>
    %1 = vector.multi_reduction <add>, %0, %cst [1] : vector<8x256xf32> to vector<8xf32>
    %2 = vector.shape_cast %1 : vector<8xf32> to vector<8x1xf32>
    %cst_1 = arith.constant 2.560000e+02 : f32
    %3 = vector.broadcast %cst_1 : f32 to vector<8x1xf32>
    %4 = arith.divf %2, %3 : vector<8x1xf32>
    %c0_2 = arith.constant 0 : index
    %c0_3 = arith.constant 0 : index
    %5 = vector.load %arg2[%c0_2, %c0_3] : memref<8x1xf32, #tpu.memory_space<vmem>>, vector<8x1xf32>
    %c0_4 = arith.constant 0 : index
    %c0_5 = arith.constant 0 : index
    %6 = vector.load %arg3[%c0_4, %c0_5] : memref<8x1xf32, #tpu.memory_space<vmem>>, vector<8x1xf32>
    %7 = arith.mulf %4, %5 : vector<8x1xf32>
    %8 = arith.subf %6, %7 : vector<8x1xf32>
    %9 = vector.broadcast %5 : vector<8x1xf32> to vector<8x256xf32>
    %10 = arith.mulf %0, %9 : vector<8x256xf32>
    %11 = vector.broadcast %8 : vector<8x1xf32> to vector<8x256xf32>
    %12 = arith.addf %10, %11 : vector<8x256xf32>
    %c0_6 = arith.constant 0 : index
    %c0_7 = arith.constant 0 : index
    %13 = vector.load %arg4[%c0_6, %c0_7] : memref<8x256xf32, #tpu.memory_space<vmem>>, vector<8x256xf32>
    tpu.vector_store %arg4[%c0_6, %c0_7], %12 {strides = array<i32>} : memref<8x256xf32, #tpu.memory_space<vmem>>, vector<8x256xf32>,
    return
  }
  func.func @transform_0(%arg0: i32) -> (i32, i32) {
    %c0_i32 = arith.constant 0 : i32
    %c0_i32_0 = arith.constant 0 : i32
    return %arg0, %c0_i32 : i32, i32
  }
  func.func @transform_1(%arg0: i32) -> (i32, i32) {
    %c0_i32 = arith.constant 0 : i32
    %c0_i32_0 = arith.constant 0 : i32
    return %arg0, %c0_i32 : i32, i32
  }
  func.func @transform_2(%arg0: i32) -> (i32, i32) {
    %c0_i32 = arith.constant 0 : i32
    %c0_i32_0 = arith.constant 0 : i32
    return %arg0, %c0_i32 : i32, i32
  }
  func.func @transform_3(%arg0: i32) -> (i32, i32) {
    %c0_i32 = arith.constant 0 : i32
    %c0_i32_0 = arith.constant 0 : i32
    return %arg0, %c0_i32 : i32, i32
  }
}

</mosaic_0001>

<llo_original>
// kernel: tpu_custom_call.1
$region0: #{tpu_custom_call.1}
  #allocation0 [shape = 'u32[]', space=smem, size = 0x4, offset = 0x4, fixed_abs, tag = 'smem constant byte address 0x4 - core index']
  #allocation1 [shape = 'u32[144,128]{1,0:T(1,128)}', space=vmem, size = 0x12000, scoped, tag = 'internal scratch']
  %s0 = inlined_call_operand.vmem [shape: f32[8,256], index: 0, kind: input, shape index: {}]
  %s1 = inlined_call_operand.vmem [shape: f32[8,1], index: 1, kind: input, shape index: {}]
  %s2 = inlined_call_operand.vmem [shape: f32[8,1], index: 2, kind: input, shape index: {}]
  %s3 = inlined_call_operand.hbm [shape: f32[8,256], index: 3, kind: output, shape index: {}]
  %s4 = sld [smem:[#allocation0]]
  $region22: #{tpu_custom_call.1} parent=0
    _
  %s6 = ssub.s32 1, %s4
  %s7 = scalar_select 0, %s6, %s4
  $region1: #{tpu_custom_call.1} parent=0
    #allocation2 [shape = 'u8[8192]{0}', space=vmem, size = 0x2000, scoped, tag = 'output window, operand 0, single buffered']
    #allocation3 [shape = 's32[1]{0}', space=sflag, size = 0x4, scoped, tag = 'scoped memory for tpu_custom_call.1']
    %8 = vsyncpa [#allocation3], 0
    // Predicated region
    $region2: #{tpu_custom_call.1} parent=1 // pred_check
      _
    $region3: #{tpu_custom_call.1} parent=1 // pred_check_branch
      %10 = sbr.rel (0) target = $region5
    $region4: #{tpu_custom_call.1} parent=1 // pred_region
      _
    $region5: #{tpu_custom_call.1} parent=1 // pred_fallthru
      _
    // Predicated region
    $region6: #{tpu_custom_call.1} parent=1 // pred_check
      _
    $region7: #{tpu_custom_call.1} parent=1 // pred_check_branch
      %12 = sbr.rel (0) target = $region9
    $region8: #{tpu_custom_call.1} parent=1 // pred_region
      _
    $region9: #{tpu_custom_call.1} parent=1 // pred_fallthru
      _
    // Predicated region
    $region10: #{tpu_custom_call.1} parent=1 // pred_check
      _
    $region11: #{tpu_custom_call.1} parent=1 // pred_check_branch
      %14 = sbr.rel (0) target = $region13
    $region12: #{tpu_custom_call.1} parent=1 // pred_region
      _
    $region13: #{tpu_custom_call.1} parent=1 // pred_fallthru
      _
    %v15 = vld [vmem:[%s0] sm:$0xff]
    %v16 = vld [vmem:[%s0 + $0x8] sm:$0xff]
    %v17 = vadd.f32 %v15, %v16
    %18 = vadd.xlane.f32.xlu0 %v17
    %v19 = vpop.xlane.xlu0 %18
    %v20 = vrcp.pop 256.0
    %v21 = vmul.f32 %v19, %v20
    %v22 = vld [vmem:[%s1] sm:$0xff]
    %v23 = vld [vmem:[%s2] sm:$0xff]
    %v24 = vmul.f32 %v21, %v22
    %v25 = vsub.f32 %v23, %v24
    %27 = vset.pattern.permute.xlu0 0
    %28 = vperm.xlu0 %27, %v22
    %v29 = vpop.permute.xlu0 %28
    %v31 = vmul.f32 %v15, %v29
    %v32 = vmul.f32 %v16, %v29
    %34 = vset.pattern.permute.xlu0 0
    %35 = vperm.xlu0 %34, %v25
    %v36 = vpop.permute.xlu0 %35
    %v38 = vadd.f32 %v31, %v36
    %v39 = vadd.f32 %v32, %v36
    %40 = vst [vmem:[#allocation2] sm:$0xff] %v38
    %41 = vst [vmem:[#allocation2 + $0x8] sm:$0xff] %v39
    // Predicated region
    $region14: #{tpu_custom_call.1} parent=1 // pred_check
      _
    $region15: #{tpu_custom_call.1} parent=1 // pred_check_branch
      %43 = sbr.rel (0) target = $region17
    $region16: #{tpu_custom_call.1} parent=1 // pred_region
      %s45 = ssub.s32 256, 256
      %46 = vsyncadd [#allocation3], %s45
      %s48 = sshll.u32 [#allocation2], 4
      %s49 = int_to_ptr.vmem [resolvable:$true] %s48
      %51 = dma.vmem_to_hbm [thread:$0]  %s49, 256, %s3, [#allocation3]
    $region17: #{tpu_custom_call.1} parent=1 // pred_fallthru
      _
    // Predicated region
    $region18: #{tpu_custom_call.1} parent=1 // pred_check
      _
    $region19: #{tpu_custom_call.1} parent=1 // pred_check_branch
      %53 = sbr.rel (0) target = $region21
    $region20: #{tpu_custom_call.1} parent=1 // pred_region
      %54 = dma.done [#allocation3], 256
    $region21: #{tpu_custom_call.1} parent=1 // pred_fallthru
      _
    %55 = vsyncpa [#allocation3], 1

</llo_original>
